<compile_context>
chip_gen: v7x
topology: tpu7x:2x2x1
jax: 0.10.0
libtpu: 0.0.40
codegen_flags: <defaults>
</compile_context>

<pallas_src>
import functools

import jax
import jax.numpy as jnp
from jax.experimental import pallas as pl
from jax.experimental.pallas import tpu as pltpu


# ----------------------------- phase 1 kernel --------------------------------
def _fse_pool_kernel(hi_ref, lo_ref, sh_ref, sl_ref, acc_h, acc_l):
    # hi_ref: (Ch, Th)   low-resolution high-branch rows (mean(up2x(x)) == mean(x))
    # lo_ref: (Cl, Tl)   low branch at output resolution       (Tl = 4*Th)
    # sh_ref/sl_ref: (Ch, 1)/(Cl, 1) per-batch spatial sums (written at last step)
    i = pl.program_id(1)

    @pl.when(i == 0)
    def _():
        acc_h[...] = jnp.zeros_like(acc_h)
        acc_l[...] = jnp.zeros_like(acc_l)

    acc_h[...] += jnp.sum(hi_ref[...].astype(jnp.float32), axis=-1, keepdims=True)
    acc_l[...] += jnp.sum(lo_ref[...].astype(jnp.float32), axis=-1, keepdims=True)

    @pl.when(i == pl.num_programs(1) - 1)
    def _():
        sh_ref[...] = acc_h[...]
        sl_ref[...] = acc_l[...]


# ----------------------------- phase 2 kernel --------------------------------
def _fse_conv_kernel(hi_ref, lo_ref, wh_ref, wl_ref, bias_ref, rep_ref, out_ref,
                     *, n_rows, w_lo):
    # hi_ref : (Ch, n_rows*W)       high branch at LOW resolution (row group)
    # lo_ref : (Cl, n_rows*2*W2)    low branch at output resolution (same rows)
    # wh_ref : (Cout, Ch)           gate-folded 1x1 conv weight, high channels
    # wl_ref : (Cout, Cl)           gate-folded 1x1 conv weight, low channels
    # bias_ref: (Cout, 1)           conv bias
    # rep_ref: (W, W2)              one-hot column-doubling matrix (W2 = 2*W)
    # out_ref: (Cout, n_rows*2*W2)  flattened NCHW output rows (lane-dense)
    rep = rep_ref[...]
    bias = bias_ref[...]

    # Channel matmuls over the whole flattened tile (gate already in weights).
    conv_h = jnp.dot(wh_ref[...], hi_ref[...],
                     preferred_element_type=jnp.float32)           # (Cout, n_rows*W)
    conv_l = jnp.dot(wl_ref[...], lo_ref[...],
                     preferred_element_type=jnp.float32)           # (Cout, n_rows*2*W2)

    # Fused nearest-neighbour 2x upsample of the high contribution:
    #   columns doubled via the one-hot matmul, rows doubled by emitting the
    #   same chunk twice (two consecutive output rows per input row).
    pieces = []
    for r in range(n_rows):
        ch2 = jnp.dot(conv_h[:, r * w_lo:(r + 1) * w_lo], rep,
                      preferred_element_type=jnp.float32)          # (Cout, W2)
        pieces += [ch2, ch2]
    hi_up = jnp.concatenate(pieces, axis=-1)                       # (Cout, n_rows*2*W2)

    out_ref[...] = jnp.maximum(hi_up + conv_l + bias, 0.0).astype(out_ref.dtype)


# ----------------------------- tiling helper ---------------------------------
def _pick_rows_per_block(h, w, c_high, c_low, c_out,
                         max_lanes=16384, vmem_block_budget=8 * 1024 * 1024):
    """Number of *input* (low-res) rows per grid step.

    Constraints: rows | H, and the high-branch lane count rows*W is either a
    multiple of 128 or the full spatial extent (Pallas (8,128) block rule).
    Targets ~0.5-1 MB per stream (<= max_lanes output lanes), bounded by a
    double-buffered VMEM budget."""
    # bytes per output lane (f32): low + out streams, plus 1/4-rate high stream,
    # times 2 for double buffering.
    bytes_per_lane = 4 * (c_low + c_out + (c_high + 3) // 4) * 2
    lane_cap = max(128, min(max_lanes, vmem_block_budget // bytes_per_lane))
    candidates = [r for r in range(1, h + 1)
                  if h % r == 0 and (r == h or (r * w) % 128 == 0)]
    fitting = [r for r in candidates if 4 * r * w <= lane_cap]
    if fitting:
        return max(fitting)
    # TODO(synk): for awkward (H, W) with no 128-aligned row group the fallback
    # is the smallest legal block (possibly the whole image); pad spatially if
    # that ever exceeds the scoped-VMEM budget on very large feature maps.
    return min(candidates)


# ------------------------------- wrapper --------------------------------------
def fse_module_forward(high_features, low_features, params, *,
                       out_dtype=None, max_block_lanes=16384):
    """high_features: (B, C_high, H, W) NCHW.
    low_features: list of (B, C_low_i, 2H, 2W) NCHW arrays.
    params: 'w1' (C, C//16), 'w2' (C//16, C), 'wc' (Cout, C), 'bc' (Cout,)
            with C = C_high + sum(C_low_i).
    Returns NCHW (B, Cout, 2H, 2W)."""
    B, Ch, H, W = high_features.shape
    lows = list(low_features)
    low = lows[0] if len(lows) == 1 else jnp.concatenate(lows, axis=1)
    _, Cl, H2, W2 = low.shape
    assert (H2, W2) == (2 * H, 2 * W), "low features must be at 2x the high resolution"
    HW, HW2 = H * W, H2 * W2
    Ctot = Ch + Cl

    w1, w2, wc, bc = params["w1"], params["w2"], params["wc"], params["bc"]
    hidden = w1.shape[1]
    Cout = wc.shape[0]
    assert w1.shape == (Ctot, hidden) and w2.shape == (hidden, Ctot)
    assert wc.shape == (Cout, Ctot) and bc.shape == (Cout,)
    if out_dtype is None:
        out_dtype = high_features.dtype

    Rh = _pick_rows_per_block(H, W, Ch, Cl, Cout, max_lanes=max_block_lanes)
    n_blk = H // Rh
    Th = Rh * W          # high-branch lanes per block (low resolution)
    Tl = Rh * 2 * W2     # low/out lanes per block (= 4 * Th)

    # Channel-major, flattened-spatial views (free reshapes of NCHW).
    high_flat = high_features.reshape(B, Ch, HW)
    low_flat = low.reshape(B, Cl, HW2)

    # -------- phase 1: tiled global average pool (grid: batch x row groups) ----
    sum_h, sum_l = pl.pallas_call(
        _fse_pool_kernel,
        out_shape=(jax.ShapeDtypeStruct((B, Ch, 1), jnp.float32),
                   jax.ShapeDtypeStruct((B, Cl, 1), jnp.float32)),
        grid_spec=pltpu.PrefetchScalarGridSpec(
            num_scalar_prefetch=0,
            grid=(B, n_blk),
            in_specs=[
                pl.BlockSpec((pl.Squeezed(), Ch, Th), lambda b, i: (b, 0, i)),
                pl.BlockSpec((pl.Squeezed(), Cl, Tl), lambda b, i: (b, 0, i)),
            ],
            out_specs=(pl.BlockSpec((pl.Squeezed(), Ch, 1), lambda b, i: (b, 0, 0)),
                       pl.BlockSpec((pl.Squeezed(), Cl, 1), lambda b, i: (b, 0, 0))),
            scratch_shapes=[pltpu.VMEM((Ch, 1), jnp.float32),
                            pltpu.VMEM((Cl, 1), jnp.float32)]),
        compiler_params=pltpu.CompilerParams(
            dimension_semantics=("parallel", "arbitrary")),
    )(high_flat, low_flat)

    # -------- tiny excitation MLP + gate folding (plain JAX; (B, C) sized) -----
    pooled = jnp.concatenate([sum_h[:, :, 0] * (1.0 / HW),      # mean(up2x(x)) == mean(x)
                              sum_l[:, :, 0] * (1.0 / HW2)], axis=1)        # (B, Ctot)
    hdn = jnp.maximum(pooled @ w1.astype(jnp.float32), 0.0)
    gate = 1.0 / (1.0 + jnp.exp(-(hdn @ w2.astype(jnp.float32))))           # (B, Ctot)

    wc32 = wc.astype(jnp.float32)
    whg = wc32[None, :, :Ch] * gate[:, None, :Ch]          # (B, Cout, Ch) gate-folded
    wlg = wc32[None, :, Ch:] * gate[:, None, Ch:]          # (B, Cout, Cl)
    bias = bc.reshape(Cout, 1).astype(jnp.float32)

    # One-hot column-doubling matrix: rep[ci, c2] = 1 iff c2 // 2 == ci.
    rep = (jnp.arange(W2)[None, :] // 2
           == jnp.arange(W)[:, None]).astype(jnp.float32)                   # (W, W2)

    # -------- phase 2: fused upsample + gated 1x1 conv + bias + ReLU -----------
    kern = functools.partial(_fse_conv_kernel, n_rows=Rh, w_lo=W)
    out_flat = pl.pallas_call(
        kern,
        out_shape=jax.ShapeDtypeStruct((B, Cout, HW2), out_dtype),
        grid_spec=pltpu.PrefetchScalarGridSpec(
            num_scalar_prefetch=0,
            grid=(B, n_blk),
            in_specs=[
                pl.BlockSpec((pl.Squeezed(), Ch, Th), lambda b, i: (b, 0, i)),
                pl.BlockSpec((pl.Squeezed(), Cl, Tl), lambda b, i: (b, 0, i)),
                pl.BlockSpec((pl.Squeezed(), Cout, Ch), lambda b, i: (b, 0, 0)),
                pl.BlockSpec((pl.Squeezed(), Cout, Cl), lambda b, i: (b, 0, 0)),
                pl.BlockSpec((Cout, 1), lambda b, i: (0, 0)),
                pl.BlockSpec((W, W2), lambda b, i: (0, 0)),
            ],
            out_specs=pl.BlockSpec((pl.Squeezed(), Cout, Tl),
                                   lambda b, i: (b, 0, i))),
        compiler_params=pltpu.CompilerParams(
            dimension_semantics=("parallel", "parallel")),
    )(high_flat, low_flat, whg, wlg, bias, rep)

    return out_flat.reshape(B, Cout, H2, W2)


# ------------------------------- reference ------------------------------------
def _reference_forward(high_features, low_features, params):
    """Pure-JAX NCHW reference matching the PyTorch module semantics."""
    up = jnp.repeat(jnp.repeat(high_features, 2, axis=2), 2, axis=3)
    feats = jnp.concatenate([up] + list(low_features), axis=1)       # NCHW
    y = jnp.mean(feats, axis=(2, 3))                                 # (B, C)
    y = jnp.maximum(y @ params["w1"], 0.0)
    y = 1.0 / (1.0 + jnp.exp(-(y @ params["w2"])))                   # (B, C)
    scaled = feats * y[:, :, None, None]
    conv = (jnp.einsum("bchw,oc->bohw", scaled, params["wc"])
            + params["bc"][None, :, None, None])
    return jnp.maximum(conv, 0.0)


if __name__ == "__main__":
    key = jax.random.PRNGKey(0)
    k_hi, k_lo, k_w1, k_w2, k_wc, k_bc = jax.random.split(key, 6)

    # fSEModule(high_feature_channel=16, low_feature_channels=16)
    # -> in_channel = 32, reduction 16 -> hidden = 2, out_channel = 16.
    high_ch, low_ch = 16, 16
    in_ch = high_ch + low_ch
    out_ch = high_ch
    hidden = in_ch // 16

    B, H, W = 2, 8, 8                                  # high-feature spatial size
    high_features = jax.random.normal(k_hi, (B, high_ch, H, W), dtype=jnp.float32)
    low_features = [jax.random.normal(k_lo, (B, low_ch, 2 * H, 2 * W),
                                      dtype=jnp.float32)]

    params = {
        # nn.Linear(in, hidden, bias=False).weight is (hidden, in); stored transposed.
        "w1": 0.1 * jax.random.normal(k_w1, (in_ch, hidden), dtype=jnp.float32),
        # nn.Linear(hidden, in, bias=False).weight is (in, hidden); stored transposed.
        "w2": 0.1 * jax.random.normal(k_w2, (hidden, in_ch), dtype=jnp.float32),
        # nn.Conv2d(in, out, 1).weight is (out, in, 1, 1); stored as (out, in).
        "wc": 0.1 * jax.random.normal(k_wc, (out_ch, in_ch), dtype=jnp.float32),
        "bc": 0.1 * jax.random.normal(k_bc, (out_ch,), dtype=jnp.float32),
    }

    out = fse_module_forward(high_features, low_features, params)
    out = jax.block_until_ready(out)

    ref = _reference_forward(high_features, low_features, params)
    assert out.shape == (B, out_ch, 2 * H, 2 * W), out.shape
    assert jnp.allclose(out, ref, rtol=1e-4, atol=1e-4), (
        "mismatch vs reference, max abs err = "
        + str(float(jnp.max(jnp.abs(out - ref)))))

    print("KERNEL_OK")
</pallas_src>

<mosaic_0001>
module attributes {stable_mosaic.version = 11 : i64} {
  func.func @_fse_pool_kernel(%arg0: i32, %arg1: i32, %arg2: memref<1x16x64xf32, #tpu.memory_space<vmem>>, %arg3: memref<1x16x256xf32, #tpu.memory_space<vmem>>, %arg4: memref<1x16x1xf32, #tpu.memory_space<vmem>>, %arg5: memref<1x16x1xf32, #tpu.memory_space<vmem>>, %arg6: memref<16x1xf32, #tpu.memory_space<vmem>>, %arg7: memref<16x1xf32, #tpu.memory_space<vmem>>) attributes {dimension_semantics = [#tpu.dimension_semantics<parallel>, #tpu.dimension_semantics<arbitrary>], iteration_bounds = array<i64: 2, 1>, scalar_prefetch = 0 : i64, scratch_operands = 2 : i64, tpu.core_type = #tpu.core_type<tc>, window_params = [{transform_indices = @transform_0, window_bounds = array<i64: 1, 16, 64>}, {transform_indices = @transform_1, window_bounds = array<i64: 1, 16, 256>}, {transform_indices = @transform_2, window_bounds = array<i64: 1, 16, 1>}, {transform_indices = @transform_3, window_bounds = array<i64: 1, 16, 1>}]} {
    %c0_i32 = arith.constant 0 : i32
    %0 = arith.cmpi eq, %arg1, %c0_i32 : i32
    %1 = arith.extui %0 : i1 to i32
    %c0_i32_0 = arith.constant 0 : i32
    %2 = arith.cmpi ne, %1, %c0_i32_0 : i32
    scf.if %2 {
      %cst_17 = arith.constant 0.000000e+00 : f32
      %20 = vector.broadcast %cst_17 : f32 to vector<16x1xf32>
      %c0_18 = arith.constant 0 : index
      %c0_19 = arith.constant 0 : index
      %21 = vector.load %arg6[%c0_18, %c0_19] : memref<16x1xf32, #tpu.memory_space<vmem>>, vector<16x1xf32>
      tpu.vector_store %arg6[%c0_18, %c0_19], %20 {strides = array<i32>} : memref<16x1xf32, #tpu.memory_space<vmem>>, vector<16x1xf32>,
      %cst_20 = arith.constant 0.000000e+00 : f32
      %22 = vector.broadcast %cst_20 : f32 to vector<16x1xf32>
      %c0_21 = arith.constant 0 : index
      %c0_22 = arith.constant 0 : index
      %23 = vector.load %arg7[%c0_21, %c0_22] : memref<16x1xf32, #tpu.memory_space<vmem>>, vector<16x1xf32>
      tpu.vector_store %arg7[%c0_21, %c0_22], %22 {strides = array<i32>} : memref<16x1xf32, #tpu.memory_space<vmem>>, vector<16x1xf32>,
    } else {
    }
    %c0 = arith.constant 0 : index
    %c0_1 = arith.constant 0 : index
    %3 = vector.load %arg6[%c0, %c0_1] : memref<16x1xf32, #tpu.memory_space<vmem>>, vector<16x1xf32>
    %c0_2 = arith.constant 0 : index
    %c0_3 = arith.constant 0 : index
    %c0_4 = arith.constant 0 : index
    %4 = vector.load %arg2[%c0_2, %c0_3, %c0_4] : memref<1x16x64xf32, #tpu.memory_space<vmem>>, vector<1x16x64xf32>
    %5 = vector.shape_cast %4 : vector<1x16x64xf32> to vector<16x64xf32>
    %cst = arith.constant dense<0.000000e+00> : vector<16xf32>
    %6 = vector.multi_reduction <add>, %5, %cst [1] : vector<16x64xf32> to vector<16xf32>
    %7 = vector.shape_cast %6 : vector<16xf32> to vector<16x1xf32>
    %8 = arith.addf %3, %7 : vector<16x1xf32>
    %c0_5 = arith.constant 0 : index
    %c0_6 = arith.constant 0 : index
    %9 = vector.load %arg6[%c0_5, %c0_6] : memref<16x1xf32, #tpu.memory_space<vmem>>, vector<16x1xf32>
    tpu.vector_store %arg6[%c0_5, %c0_6], %8 {strides = array<i32>} : memref<16x1xf32, #tpu.memory_space<vmem>>, vector<16x1xf32>,
    %c0_7 = arith.constant 0 : index
    %c0_8 = arith.constant 0 : index
    %10 = vector.load %arg7[%c0_7, %c0_8] : memref<16x1xf32, #tpu.memory_space<vmem>>, vector<16x1xf32>
    %c0_9 = arith.constant 0 : index
    %c0_10 = arith.constant 0 : index
    %c0_11 = arith.constant 0 : index
    %11 = vector.load %arg3[%c0_9, %c0_10, %c0_11] : memref<1x16x256xf32, #tpu.memory_space<vmem>>, vector<1x16x256xf32>
    %12 = vector.shape_cast %11 : vector<1x16x256xf32> to vector<16x256xf32>
    %cst_12 = arith.constant dense<0.000000e+00> : vector<16xf32>
    %13 = vector.multi_reduction <add>, %12, %cst_12 [1] : vector<16x256xf32> to vector<16xf32>
    %14 = vector.shape_cast %13 : vector<16xf32> to vector<16x1xf32>
    %15 = arith.addf %10, %14 : vector<16x1xf32>
    %c0_13 = arith.constant 0 : index
    %c0_14 = arith.constant 0 : index
    %16 = vector.load %arg7[%c0_13, %c0_14] : memref<16x1xf32, #tpu.memory_space<vmem>>, vector<16x1xf32>
    tpu.vector_store %arg7[%c0_13, %c0_14], %15 {strides = array<i32>} : memref<16x1xf32, #tpu.memory_space<vmem>>, vector<16x1xf32>,
    %c0_i32_15 = arith.constant 0 : i32
    %17 = arith.cmpi eq, %arg1, %c0_i32_15 : i32
    %18 = arith.extui %17 : i1 to i32
    %c0_i32_16 = arith.constant 0 : i32
    %19 = arith.cmpi ne, %18, %c0_i32_16 : i32
    scf.if %19 {
      %c0_17 = arith.constant 0 : index
      %c0_18 = arith.constant 0 : index
      %20 = vector.load %arg6[%c0_17, %c0_18] : memref<16x1xf32, #tpu.memory_space<vmem>>, vector<16x1xf32>
      %c0_19 = arith.constant 0 : index
      %c0_20 = arith.constant 0 : index
      %c0_21 = arith.constant 0 : index
      %21 = vector.load %arg4[%c0_19, %c0_20, %c0_21] : memref<1x16x1xf32, #tpu.memory_space<vmem>>, vector<1x16x1xf32>
      %22 = vector.shape_cast %21 : vector<1x16x1xf32> to vector<16x1xf32>
      %23 = vector.shape_cast %20 : vector<16x1xf32> to vector<1x16x1xf32>
      tpu.vector_store %arg4[%c0_19, %c0_20, %c0_21], %23 {strides = array<i32>} : memref<1x16x1xf32, #tpu.memory_space<vmem>>, vector<1x16x1xf32>,
      %c0_22 = arith.constant 0 : index
      %c0_23 = arith.constant 0 : index
      %24 = vector.load %arg7[%c0_22, %c0_23] : memref<16x1xf32, #tpu.memory_space<vmem>>, vector<16x1xf32>
      %c0_24 = arith.constant 0 : index
      %c0_25 = arith.constant 0 : index
      %c0_26 = arith.constant 0 : index
      %25 = vector.load %arg5[%c0_24, %c0_25, %c0_26] : memref<1x16x1xf32, #tpu.memory_space<vmem>>, vector<1x16x1xf32>
      %26 = vector.shape_cast %25 : vector<1x16x1xf32> to vector<16x1xf32>
      %27 = vector.shape_cast %24 : vector<16x1xf32> to vector<1x16x1xf32>
      tpu.vector_store %arg5[%c0_24, %c0_25, %c0_26], %27 {strides = array<i32>} : memref<1x16x1xf32, #tpu.memory_space<vmem>>, vector<1x16x1xf32>,
    } else {
    }
    return
  }
  func.func @transform_0(%arg0: i32, %arg1: i32) -> (i32, i32, i32) {
    %c0_i32 = arith.constant 0 : i32
    %c0_i32_0 = arith.constant 0 : i32
    return %arg0, %c0_i32, %arg1 : i32, i32, i32
  }
  func.func @transform_1(%arg0: i32, %arg1: i32) -> (i32, i32, i32) {
    %c0_i32 = arith.constant 0 : i32
    %c0_i32_0 = arith.constant 0 : i32
    return %arg0, %c0_i32, %arg1 : i32, i32, i32
  }
  func.func @transform_2(%arg0: i32, %arg1: i32) -> (i32, i32, i32) {
    %c0_i32 = arith.constant 0 : i32
    %c0_i32_0 = arith.constant 0 : i32
    %c0_i32_1 = arith.constant 0 : i32
    return %arg0, %c0_i32, %c0_i32_0 : i32, i32, i32
  }
  func.func @transform_3(%arg0: i32, %arg1: i32) -> (i32, i32, i32) {
    %c0_i32 = arith.constant 0 : i32
    %c0_i32_0 = arith.constant 0 : i32
    %c0_i32_1 = arith.constant 0 : i32
    return %arg0, %c0_i32, %c0_i32_0 : i32, i32, i32
  }
}

</mosaic_0001>

<llo_original>
// kernel: tpu_custom_call.1
$region0: #{tpu_custom_call.1}
  #allocation0 [shape = 'u32[]', space=smem, size = 0x4, offset = 0x4, fixed_abs, tag = 'smem constant byte address 0x4 - core index']
  #allocation1 [shape = 'u32[144,128]{1,0:T(1,128)}', space=vmem, size = 0x12000, scoped, tag = 'internal scratch']
  #allocation2 [shape = 'f32[16,1]{1,0:T(8,128)}', space=vmem, size = 0x2000, scoped, tag = 'scratch operand']
  #allocation3 [shape = 'f32[16,1]{1,0:T(8,128)}', space=vmem, size = 0x2000, scoped, tag = 'scratch operand']
  %s0 = inlined_call_operand.hbm [shape: f32[2,16,64], index: 0, kind: input, shape index: {}]
  %s1 = inlined_call_operand.hbm [shape: f32[2,16,256], index: 1, kind: input, shape index: {}]
  %s2 = inlined_call_operand.vmem [shape: f32[2,16,1], index: 2, kind: output, shape index: {0}]
  %s3 = inlined_call_operand.vmem [shape: f32[2,16,1], index: 3, kind: output, shape index: {1}]
  %4 = xla_tuple %s2, %s3
  %s5 = sld [smem:[#allocation0]]
  $region65: #{tpu_custom_call.1} parent=0
    _
  %s7 = ssub.s32 1, %s5
  %s8 = scalar_select 0, %s7, %s5
  $region1: #{tpu_custom_call.1} parent=0
    #allocation4 [shape = 'u8[16384]{0}', space=vmem, size = 0x4000, scoped, tag = 'input window, operand 0']
    #allocation5 [shape = 's32[2]{0}', space=sflag, size = 0x8, scoped, tag = 'scoped memory for tpu_custom_call.1']
    #allocation6 [shape = 'u8[32768]{0}', space=vmem, size = 0x8000, scoped, tag = 'input window, operand 1']
    #allocation7 [shape = 's32[2]{0}', space=sflag, size = 0x8, scoped, tag = 'scoped memory for tpu_custom_call.1']
    %9 = vsyncpa [#allocation5], 0
    %s10 = scalar_lea.sflag [#allocation5], 1
    %11 = vsyncpa %s10, 0
    %12 = vsyncpa [#allocation7], 0
    %s13 = scalar_lea.sflag [#allocation7], 1
    %14 = vsyncpa %s13, 0
    loop: start=0, step=1, limit=4
    $region2: #{tpu_custom_call.1} parent=1 // loop_pre_header
      _
    $region3: #{tpu_custom_call.1} parent=1 // loop_header
      %s16 = sphi 0, %s20
      %p17 = scmp.ge.s32.totalorder %s16, 4
      %s23 = sphi 0, %s35
      %s24 = sphi 0, %s31
      %s25 = sphi 0, %s23
      %s26 = sphi 0, %s24
      %s27 = sphi 0, %s25
      %s28 = sphi 0, %s26
      %s40 = sphi 0, %s42
      %s43 = sphi 0, %s40
      %s44 = sphi 0, %s43
      %s60 = sphi 0, %s44
      %s68 = sphi 0, %s70
      %s71 = sphi 0, %s68
      %s72 = sphi 0, %s71
      %s88 = sphi 0, %s72
      %s94 = sphi 0, %s96
      %s97 = sphi 0, %s94
      %s98 = sphi 0, %s97
      %s114 = sphi 0, %s98
      %s120 = sphi 0, %s122
      %s123 = sphi 0, %s120
      %s124 = sphi 0, %s123
      %s140 = sphi 0, %s124
    $region4: #{tpu_custom_call.1} parent=1 // loop_header_branch
      %19 = sbr.rel (%p17) target = $region8
    $region5: #{tpu_custom_call.1} parent=1 // loop_body
      %s21 = ssub.s32 %s16, 1
      %s22 = ssub.s32 %s16, 2
      %s29 = sadd.s32 1, %s24
      %p30 = scmp.ge.s32.totalorder %s29, 1
      %s31 = scalar_select %p30, 0, %s29
      %s32 = sadd.s32 1, %s23
      %s33 = scalar_select %p30, %s32, %s23
      %p34 = scmp.ge.s32.totalorder %s33, 2
      %s35 = scalar_select %p34, 0, %s33
      %s36 = ssub.s32 %s23, %s35
      %s37 = ssub.s32 %s24, %s31
      %s38 = sor.u32 %s36, %s37
      %p39 = scmp.eq.s32.totalorder %s38, 0
      %s41 = sadd.s32 %s40, 1
      %s42 = scalar_select %p39, %s40, %s41
      %p45 = pneg %p39
      %p46 = scmp.eq.s32.totalorder %s16, 1
      %p47 = por %p45, %p46
      %p48 = scmp.ne.s32.totalorder %s40, %s43
      %p49 = scmp.eq.s32.totalorder %s16, 0
      %p50 = por %p48, %p49
      %p51 = scmp.ne.s32.totalorder %s40, %s43
      %p52 = scmp.eq.s32.totalorder %s21, 1
      %p53 = por %p51, %p52
      %p54 = scmp.ne.s32.totalorder %s43, %s44
      %p55 = scmp.eq.s32.totalorder %s21, 0
      %p56 = por %p54, %p55
      %p57 = scmp.ne.s32.totalorder %s43, %s44
      %p58 = scmp.eq.s32.totalorder %s22, 1
      %p59 = por %p57, %p58
      %p61 = scmp.ne.s32.totalorder %s44, %s60
      %p62 = scmp.eq.s32.totalorder %s22, 0
      %p63 = por %p61, %p62
      %s64 = ssub.s32 %s23, %s35
      %s65 = ssub.s32 %s24, %s31
      %s66 = sor.u32 %s64, %s65
      %p67 = scmp.eq.s32.totalorder %s66, 0
      %s69 = sadd.s32 %s68, 1
      %s70 = scalar_select %p67, %s68, %s69
      %p73 = pneg %p67
      %p74 = scmp.eq.s32.totalorder %s16, 1
      %p75 = por %p73, %p74
      %p76 = scmp.ne.s32.totalorder %s68, %s71
      %p77 = scmp.eq.s32.totalorder %s16, 0
      %p78 = por %p76, %p77
      %p79 = scmp.ne.s32.totalorder %s68, %s71
      %p80 = scmp.eq.s32.totalorder %s21, 1
      %p81 = por %p79, %p80
      %p82 = scmp.ne.s32.totalorder %s71, %s72
      %p83 = scmp.eq.s32.totalorder %s21, 0
      %p84 = por %p82, %p83
      %p85 = scmp.ne.s32.totalorder %s71, %s72
      %p86 = scmp.eq.s32.totalorder %s22, 1
      %p87 = por %p85, %p86
      %p89 = scmp.ne.s32.totalorder %s72, %s88
      %p90 = scmp.eq.s32.totalorder %s22, 0
      %p91 = por %p89, %p90
      %s92 = ssub.s32 %s23, %s35
      %p93 = scmp.eq.s32.totalorder %s92, 0
      %s95 = sadd.s32 %s94, 1
      %s96 = scalar_select %p93, %s94, %s95
      %p99 = pneg %p93
      %p100 = scmp.eq.s32.totalorder %s16, 1
      %p101 = por %p99, %p100
      %p102 = scmp.ne.s32.totalorder %s94, %s97
      %p103 = scmp.eq.s32.totalorder %s16, 0
      %p104 = por %p102, %p103
      %p105 = scmp.ne.s32.totalorder %s94, %s97
      %p106 = scmp.eq.s32.totalorder %s21, 1
      %p107 = por %p105, %p106
      %p108 = scmp.ne.s32.totalorder %s97, %s98
      %p109 = scmp.eq.s32.totalorder %s21, 0
      %p110 = por %p108, %p109
      %p111 = scmp.ne.s32.totalorder %s97, %s98
      %p112 = scmp.eq.s32.totalorder %s22, 1
      %p113 = por %p111, %p112
      %p115 = scmp.ne.s32.totalorder %s98, %s114
      %p116 = scmp.eq.s32.totalorder %s22, 0
      %p117 = por %p115, %p116
      %s118 = ssub.s32 %s23, %s35
      %p119 = scmp.eq.s32.totalorder %s118, 0
      %s121 = sadd.s32 %s120, 1
      %s122 = scalar_select %p119, %s120, %s121
      %p125 = pneg %p119
      %p126 = scmp.eq.s32.totalorder %s16, 1
      %p127 = por %p125, %p126
      %p128 = scmp.ne.s32.totalorder %s120, %s123
      %p129 = scmp.eq.s32.totalorder %s16, 0
      %p130 = por %p128, %p129
      %p131 = scmp.ne.s32.totalorder %s120, %s123
      %p132 = scmp.eq.s32.totalorder %s21, 1
      %p133 = por %p131, %p132
      %p134 = scmp.ne.s32.totalorder %s123, %s124
      %p135 = scmp.eq.s32.totalorder %s21, 0
      %p136 = por %p134, %p135
      %p137 = scmp.ne.s32.totalorder %s123, %s124
      %p138 = scmp.eq.s32.totalorder %s22, 1
      %p139 = por %p137, %p138
      %p141 = scmp.ne.s32.totalorder %s124, %s140
      %p142 = scmp.eq.s32.totalorder %s22, 0
      %p143 = por %p141, %p142
      %p144 = scmp.le.s32.totalorder 1, %s16
      %p145 = scmp.lt.s32.totalorder %s16, 3
      %p146 = pnand %p144, %p145
      %p147 = pneg %p146
      // Predicated region
      $region9: #{tpu_custom_call.1} parent=5 // pred_check
        _
      $region10: #{tpu_custom_call.1} parent=5 // pred_check_branch
        %149 = sbr.rel (%p146) target = $region12
      $region11: #{tpu_custom_call.1} parent=5 // pred_region
        %s150 = ssub.s32 %s16, 1
      $region12: #{tpu_custom_call.1} parent=5 // pred_fallthru
        _
      %p151 = scmp.lt.s32.totalorder %s16, 2
      // Predicated region
      $region13: #{tpu_custom_call.1} parent=5 // pred_check
        %p152 = pneg %p151
      $region14: #{tpu_custom_call.1} parent=5 // pred_check_branch
        %154 = sbr.rel (%p152) target = $region16
      $region15: #{tpu_custom_call.1} parent=5 // pred_region
        // Predicated region
        $region17: #{tpu_custom_call.1} parent=15 // pred_check
          %p155 = pneg %p50
        $region18: #{tpu_custom_call.1} parent=15 // pred_check_branch
          %157 = sbr.rel (%p155) target = $region20
        $region19: #{tpu_custom_call.1} parent=15 // pred_region
          %s158 = sand.u32 %s40, 1
          %s159 = scalar_lea.sflag [#allocation5], %s158
          %s160 = sand.u32 %s40, 1
          %s161 = smul.addr %s160, 16
          %s162 = scalar_lea.vmem [#allocation4], %s161
          %s164 = ssub.s32 256, 256
          %165 = vsyncadd %s159, %s164
          %s166 = smul.addr %s23, 2
          %s167 = sadd.s32 %s24, %s166
          %s168 = smul.addr %s167, 128
          %s169 = scalar_lea.hbm %s0, %s168
          %s170 = sshll.u32 %s162, 4
          %s171 = int_to_ptr.vmem [resolvable:$true] %s170
          %176 = dma.hbm_to_vmem [thread:$0]  %s169, 256, %s171, %s159, 128, 128, 8
        $region20: #{tpu_custom_call.1} parent=15 // pred_fallthru
          _
        // Predicated region
        $region21: #{tpu_custom_call.1} parent=15 // pred_check
          %p177 = pneg %p78
        $region22: #{tpu_custom_call.1} parent=15 // pred_check_branch
          %179 = sbr.rel (%p177) target = $region24
        $region23: #{tpu_custom_call.1} parent=15 // pred_region
          %s180 = sand.u32 %s68, 1
          %s181 = scalar_lea.sflag [#allocation7], %s180
          %s182 = sand.u32 %s68, 1
          %s183 = smul.addr %s182, 32
          %s184 = scalar_lea.vmem [#allocation6], %s183
          %s185 = smul.u32 2, %s24
          %s187 = ssub.s32 512, 512
          %188 = vsyncadd %s181, %s187
          %s189 = smul.addr %s23, 4
          %s190 = sadd.s32 %s185, %s189
          %s191 = smul.addr %s190, 128
          %s192 = scalar_lea.hbm %s1, %s191
          %s193 = sshll.u32 %s184, 4
          %s194 = int_to_ptr.vmem [resolvable:$true] %s193
          %199 = dma.hbm_to_vmem [thread:$0]  %s192, 512, %s194, %s181, 256, 256, 16
        $region24: #{tpu_custom_call.1} parent=15 // pred_fallthru
          _
      $region16: #{tpu_custom_call.1} parent=5 // pred_fallthru
        _
      %p200 = scmp.le.s32.totalorder 1, %s16
      %p201 = scmp.lt.s32.totalorder %s16, 3
      %p202 = pnand %p200, %p201
      %p203 = pneg %p202
      // Predicated region
      $region25: #{tpu_custom_call.1} parent=5 // pred_check
        _
      $region26: #{tpu_custom_call.1} parent=5 // pred_check_branch
        %205 = sbr.rel (%p202) target = $region28
      $region27: #{tpu_custom_call.1} parent=5 // pred_region
        %s206 = ssub.s32 %s16, 1
        %s207 = sand.u32 %s43, 1
        %s208 = scalar_lea.sflag [#allocation5], %s207
        %s209 = sand.u32 %s43, 1
        %s210 = smul.addr %s209, 16
        %s211 = scalar_lea.vmem [#allocation4], %s210
        // Predicated region
        $region29: #{tpu_custom_call.1} parent=27 // pred_check
          %p212 = pneg %p56
        $region30: #{tpu_custom_call.1} parent=27 // pred_check_branch
          %214 = sbr.rel (%p212) target = $region32
        $region31: #{tpu_custom_call.1} parent=27 // pred_region
          %215 = dma.done %s208, 256
        $region32: #{tpu_custom_call.1} parent=27 // pred_fallthru
          _
        %s216 = sand.u32 %s71, 1
        %s217 = scalar_lea.sflag [#allocation7], %s216
        %s218 = sand.u32 %s71, 1
        %s219 = smul.addr %s218, 32
        %s220 = scalar_lea.vmem [#allocation6], %s219
        // Predicated region
        $region33: #{tpu_custom_call.1} parent=27 // pred_check
          %p221 = pneg %p84
        $region34: #{tpu_custom_call.1} parent=27 // pred_check_branch
          %223 = sbr.rel (%p221) target = $region36
        $region35: #{tpu_custom_call.1} parent=27 // pred_region
          %224 = dma.done %s217, 512
        $region36: #{tpu_custom_call.1} parent=27 // pred_fallthru
          _
        %s225 = sand.u32 %s43, 1
        %s226 = scalar_lea.sflag [#allocation5], %s225
        %s227 = sand.u32 %s43, 1
        %s228 = smul.addr %s227, 16
        %s229 = scalar_lea.vmem [#allocation4], %s228
        %p230 = pneg %p56
        %p231 = pneg %p53
        %s232 = sand.u32 %s71, 1
        %s233 = scalar_lea.sflag [#allocation7], %s232
        %s234 = sand.u32 %s71, 1
        %s235 = smul.addr %s234, 32
        %s236 = scalar_lea.vmem [#allocation6], %s235
        %p237 = pneg %p84
        %p238 = pneg %p81
        %p239 = pneg %p110
        %p240 = pneg %p107
        %p241 = scmp.lt.s32.totalorder %s25, 1
        %s242 = scalar_select %p241, %s25, 1
        %s243 = smul.addr %s242, 2
        %s244 = smul.addr %s243, 8
        %s245 = scalar_lea.vmem %s2, %s244
        %p246 = pneg %p136
        %p247 = pneg %p133
        %p248 = scmp.lt.s32.totalorder %s25, 1
        %s249 = scalar_select %p248, %s25, 1
        %s250 = smul.addr %s249, 2
        %s251 = smul.addr %s250, 8
        %s252 = scalar_lea.vmem %s3, %s251
        %s253 = smul.u32 2, %s26
        %p254 = scmp.lt.s32.totalorder %s25, 1
        %s255 = scalar_select %p254, %s25, 1
        %s256 = smul.addr %s255, 2
        %s257 = smul.addr %s256, 8
        %s258 = scalar_lea.vmem %s2, %s257
        %p259 = scmp.lt.s32.totalorder %s25, 1
        %s260 = scalar_select %p259, %s25, 1
        %s261 = smul.addr %s260, 2
        %s262 = smul.addr %s261, 8
        %s263 = scalar_lea.vmem %s3, %s262
        %p264 = scmp.eq.s32.totalorder %s26, 0
        // Predicated region
        $region37: #{tpu_custom_call.1} parent=27 // pred_check
          %p265 = pneg %p264
        $region38: #{tpu_custom_call.1} parent=27 // pred_check_branch
          %267 = sbr.rel (%p265) target = $region40
        $region39: #{tpu_custom_call.1} parent=27 // pred_region
          %vm268 = vcmask 7168
          %269 = vst.msk [vmem:[#allocation2] sm:$0xff] %vm268, 0.0
          %270 = vst.msk [vmem:[#allocation2 + $0x8] sm:$0xff] %vm268, 0.0
          %271 = vst.msk [vmem:[#allocation3] sm:$0xff] %vm268, 0.0
          %272 = vst.msk [vmem:[#allocation3 + $0x8] sm:$0xff] %vm268, 0.0
        $region40: #{tpu_custom_call.1} parent=27 // pred_fallthru
          _
        %v273 = vld [vmem:[#allocation2] sm:$0xff]
        %v274 = vld [vmem:[#allocation2 + $0x8] sm:$0xff]
        %v275 = vld [vmem:[%s211] sm:$0xff]
        %v276 = vld [vmem:[%s211 + $0x8] sm:$0xff]
        %vm277 = vcmask 523264
        %v278 = vsel %vm277, %v275, 0.0
        %279 = vadd.xlane.f32.xlu0 %v278
        %v280 = vpop.xlane.xlu0 %279
        %v281 = vsel %vm277, %v276, 0.0
        %282 = vadd.xlane.f32.xlu0 %v281
        %v283 = vpop.xlane.xlu0 %282
        %v284 = vadd.f32 %v273, %v280
        %v285 = vadd.f32 %v274, %v283
        %vm286 = vcmask 7168
        %287 = vst.msk [vmem:[#allocation2] sm:$0xff] %vm286, %v284
        %288 = vst.msk [vmem:[#allocation2 + $0x8] sm:$0xff] %vm286, %v285
        %v289 = vld [vmem:[#allocation3] sm:$0xff]
        %v290 = vld [vmem:[#allocation3 + $0x8] sm:$0xff]
        %v291 = vld [vmem:[%s220] sm:$0xff]
        %v292 = vld [vmem:[%s220 + $0x8] sm:$0xff]
        %v293 = vld [vmem:[%s220 + $0x10] sm:$0xff]
        %v294 = vld [vmem:[%s220 + $0x18] sm:$0xff]
        %v295 = vadd.f32 %v291, %v292
        %296 = vadd.xlane.f32.xlu0 %v295
        %v297 = vpop.xlane.xlu0 %296
        %v298 = vadd.f32 %v293, %v294
        %299 = vadd.xlane.f32.xlu0 %v298
        %v300 = vpop.xlane.xlu0 %299
        %v301 = vadd.f32 %v289, %v297
        %v302 = vadd.f32 %v290, %v300
        %303 = vst.msk [vmem:[#allocation3] sm:$0xff] %vm286, %v301
        %304 = vst.msk [vmem:[#allocation3 + $0x8] sm:$0xff] %vm286, %v302
        // Predicated region
        $region41: #{tpu_custom_call.1} parent=27 // pred_check
          %p305 = pneg %p264
        $region42: #{tpu_custom_call.1} parent=27 // pred_check_branch
          %307 = sbr.rel (%p305) target = $region44
        $region43: #{tpu_custom_call.1} parent=27 // pred_region
          %v308 = vld [vmem:[#allocation2] sm:$0xff]
          %v309 = vld [vmem:[#allocation2 + $0x8] sm:$0xff]
          %310 = vst.msk [vmem:[%s258] sm:$0xff] %vm286, %v308
          %311 = vst.msk [vmem:[%s258 + $0x8] sm:$0xff] %vm286, %v309
          %v312 = vld [vmem:[#allocation3] sm:$0xff]
          %v313 = vld [vmem:[#allocation3 + $0x8] sm:$0xff]
          %314 = vst.msk [vmem:[%s263] sm:$0xff] %vm286, %v312
          %315 = vst.msk [vmem:[%s263 + $0x8] sm:$0xff] %vm286, %v313
        $region44: #{tpu_custom_call.1} parent=27 // pred_fallthru
          _
        %p316 = scmp.lt.s32.totalorder %s25, 1
        %s317 = scalar_select %p316, %s25, 1
        %s318 = smul.addr %s317, 2
        %s319 = smul.addr %s318, 8
        %s320 = scalar_lea.vmem %s2, %s319
        %p321 = scmp.lt.s32.totalorder %s25, 1
        %s322 = scalar_select %p321, %s25, 1
        %s323 = smul.addr %s322, 2
        %s324 = smul.addr %s323, 8
        %s325 = scalar_lea.vmem %s3, %s324
        // Predicated region
        $region45: #{tpu_custom_call.1} parent=27 // pred_check
          %p326 = pneg %p107
        $region46: #{tpu_custom_call.1} parent=27 // pred_check_branch
          %328 = sbr.rel (%p326) target = $region48
        $region47: #{tpu_custom_call.1} parent=27 // pred_region
          _
        $region48: #{tpu_custom_call.1} parent=27 // pred_fallthru
          _
        // Predicated region
        $region49: #{tpu_custom_call.1} parent=27 // pred_check
          %p329 = pneg %p133
        $region50: #{tpu_custom_call.1} parent=27 // pred_check_branch
          %331 = sbr.rel (%p329) target = $region52
        $region51: #{tpu_custom_call.1} parent=27 // pred_region
          _
        $region52: #{tpu_custom_call.1} parent=27 // pred_fallthru
          _
      $region28: #{tpu_custom_call.1} parent=5 // pred_fallthru
        _
      %p332 = scmp.le.s32.totalorder 2, %s16
      // Predicated region
      $region53: #{tpu_custom_call.1} parent=5 // pred_check
        %p333 = pneg %p332
      $region54: #{tpu_custom_call.1} parent=5 // pred_check_branch
        %335 = sbr.rel (%p333) target = $region56
      $region55: #{tpu_custom_call.1} parent=5 // pred_region
        %s336 = ssub.s32 %s16, 2
        // Predicated region
        $region57: #{tpu_custom_call.1} parent=55 // pred_check
          %p337 = pneg %p113
        $region58: #{tpu_custom_call.1} parent=55 // pred_check_branch
          %339 = sbr.rel (%p337) target = $region60
        $region59: #{tpu_custom_call.1} parent=55 // pred_region
          %p340 = scmp.lt.s32.totalorder %s27, 1
          %s341 = scalar_select %p340, %s27, 1
          %s342 = smul.addr %s341, 2
          %s343 = smul.addr %s342, 8
          %s344 = scalar_lea.vmem %s2, %s343
        $region60: #{tpu_custom_call.1} parent=55 // pred_fallthru
          _
        // Predicated region
        $region61: #{tpu_custom_call.1} parent=55 // pred_check
          %p345 = pneg %p139
        $region62: #{tpu_custom_call.1} parent=55 // pred_check_branch
          %347 = sbr.rel (%p345) target = $region64
        $region63: #{tpu_custom_call.1} parent=55 // pred_region
          %p348 = scmp.lt.s32.totalorder %s27, 1
          %s349 = scalar_select %p348, %s27, 1
          %s350 = smul.addr %s349, 2
          %s351 = smul.addr %s350, 8
          %s352 = scalar_lea.vmem %s3, %s351
        $region64: #{tpu_custom_call.1} parent=55 // pred_fallthru
          _
      $region56: #{tpu_custom_call.1} parent=5 // pred_fallthru
        _
    $region6: #{tpu_custom_call.1} parent=1 // loop_footer
      %s20 = sadd.s32 1, %s16
    $region7: #{tpu_custom_call.1} parent=1 // loop_footer_branch
      %15 = sbr.rel target = $region3
    $region8: #{tpu_custom_call.1} parent=1 // loop_exit
      _
    %353 = vsyncpa [#allocation5], 1
    %s354 = scalar_lea.sflag [#allocation5], 1
    %355 = vsyncpa %s354, 1
    %356 = vsyncpa [#allocation7], 1
    %s357 = scalar_lea.sflag [#allocation7], 1
    %358 = vsyncpa %s357, 1

</llo_original>
